<compile_context>
chip_gen: v5e
topology: v5e:2x2
jax: 0.10.0
libtpu: 0.0.40
codegen_flags: <defaults>
</compile_context>

<pallas_src>
import numpy as np
import jax
import jax.numpy as jnp
from jax import lax
from jax.experimental import pallas as pl
from jax.experimental.pallas import tpu as pltpu

_BN_EPS = 1e-5


# ---------------------------------------------------------------------------
# Fused double_conv kernel (one batch element per grid step).
# Activations are row-flattened NHWC: (H, W*C) with W*C on the lane axis.
# ---------------------------------------------------------------------------
def _double_conv_kernel(x_ref, sdn_ref, sup_ref,
                        b1_ref, c1_ref, b2_ref, c2_ref, o_ref):
    # x_ref  : (H, W*Cin)              lane-dense input rows
    # sdn_ref: (H, H)                  shift-down matrix (row h <- row h-1, row 0 -> 0)
    # sup_ref: (H, H)                  shift-up   matrix (row h <- row h+1, row H-1 -> 0)
    # b?_ref : (3, W*Cin_l, W*Cout_l)  banded, BN-folded weights (band index = dy)
    # c?_ref : (1, W*Cout_l)           folded bias, tiled across the W positions
    # o_ref  : (H, W*Cout)             lane-dense output rows
    sdn = sdn_ref[...]
    sup = sup_ref[...]

    def conv3x3_bn_relu(x, w_ref, bias_ref):
        # Vertical taps: align input rows h-1 / h / h+1 with output row h.
        # (Equivalently a pltpu.roll + edge mask on the XLU; the shift matmuls are
        #  exact, branch-free and essentially free next to the main matmuls.)
        x_dn = jnp.dot(sdn, x, preferred_element_type=jnp.float32)
        x_up = jnp.dot(sup, x, preferred_element_type=jnp.float32)
        # Horizontal taps + Cin contraction + zero padding along W are encoded in
        # the banded weights -> 3 MXU matmuls, no per-tap slice/reshape copies.
        acc = jnp.dot(x_dn, w_ref[0], preferred_element_type=jnp.float32)
        acc = acc + jnp.dot(x,    w_ref[1], preferred_element_type=jnp.float32)
        acc = acc + jnp.dot(x_up, w_ref[2], preferred_element_type=jnp.float32)
        return jnp.maximum(acc + bias_ref[...], 0.0)        # folded BN bias + ReLU

    y1 = conv3x3_bn_relu(x_ref[...].astype(jnp.float32), b1_ref, c1_ref)
    y2 = conv3x3_bn_relu(y1, b2_ref, c2_ref)                # stays in VMEM/vregs
    o_ref[...] = y2.astype(o_ref.dtype)


def _double_conv_pallas(x_rows, sdn, sup, B1, c1, B2, c2):
    N, H, WCin = x_rows.shape
    WCmid = B1.shape[2]
    WCout = B2.shape[2]
    return pl.pallas_call(
        _double_conv_kernel,
        out_shape=jax.ShapeDtypeStruct((N, H, WCout), x_rows.dtype),
        grid=(N,),
        in_specs=[
            pl.BlockSpec((None, H, WCin), lambda n: (n, 0, 0)),
            pl.BlockSpec((H, H), lambda n: (0, 0)),
            pl.BlockSpec((H, H), lambda n: (0, 0)),
            pl.BlockSpec((3, WCin, WCmid), lambda n: (0, 0, 0)),
            pl.BlockSpec((1, WCmid), lambda n: (0, 0)),
            pl.BlockSpec((3, WCmid, WCout), lambda n: (0, 0, 0)),
            pl.BlockSpec((1, WCout), lambda n: (0, 0)),
        ],
        out_specs=pl.BlockSpec((None, H, WCout), lambda n: (n, 0, 0)),
        compiler_params=pltpu.CompilerParams(
            dimension_semantics=("parallel",)),
    )(x_rows, sdn, sup, B1, c1, B2, c2)


# ---------------------------------------------------------------------------
# Parameter construction (mirrors nn.Conv2d / nn.BatchNorm2d shapes) and the
# one-time host-side fold into banded, BN-folded weights.
# ---------------------------------------------------------------------------
def _init_conv_bn(key, cin, cout):
    kw, kb, kg, kbt, km, kv = jax.random.split(key, 6)
    bound = 1.0 / np.sqrt(cin * 9)
    w = jax.random.uniform(kw, (cout, cin, 3, 3), jnp.float32, -bound, bound)
    b = jax.random.uniform(kb, (cout,), jnp.float32, -bound, bound)
    gamma = 1.0 + 0.1 * jax.random.normal(kg, (cout,), jnp.float32)
    beta = 0.1 * jax.random.normal(kbt, (cout,), jnp.float32)
    mean = 0.1 * jax.random.normal(km, (cout,), jnp.float32)
    var = 0.5 + jnp.abs(jax.random.normal(kv, (cout,), jnp.float32))
    return dict(w=w, b=b, gamma=gamma, beta=beta, mean=mean, var=var)


def init_inconv_params(key, in_ch, out_ch):
    k1, k2 = jax.random.split(key)
    return [_init_conv_bn(k1, in_ch, out_ch), _init_conv_bn(k2, out_ch, out_ch)]


def _fold_conv_bn_banded(p, W):
    """OIHW conv weight + eval-mode BN -> banded (3, W*Cin, W*Cout) weights and a
    (1, W*Cout) bias.  For band dy and output column (w, co):
      B[dy, j*Cin+ci, w*Cout+co] = scale[co] * weight[co, ci, dy, j-w+1] if 0<=j-w+1<3
    which implements the 3 horizontal taps and the zero padding along W."""
    w = np.asarray(p["w"], np.float32)                      # (Cout, Cin, 3, 3)
    cout, cin = w.shape[0], w.shape[1]
    scale = np.asarray(p["gamma"], np.float32) / np.sqrt(
        np.asarray(p["var"], np.float32) + _BN_EPS)
    bias = (np.asarray(p["beta"], np.float32)
            - np.asarray(p["mean"], np.float32) * scale
            + np.asarray(p["b"], np.float32) * scale)
    wf = w * scale[:, None, None, None]                     # fold BN scale into weights

    B = np.zeros((3, W * cin, W * cout), np.float32)
    for dy in range(3):
        for wcol in range(W):
            for dx in range(3):
                j = wcol + dx - 1
                if 0 <= j < W:
                    B[dy, j * cin:(j + 1) * cin,
                      wcol * cout:(wcol + 1) * cout] = wf[:, :, dy, dx].T
    bias_wide = np.tile(bias, W).reshape(1, W * cout)
    return jnp.asarray(B), jnp.asarray(bias_wide)


def fold_inconv_params(params, H, W):
    (B1, c1) = _fold_conv_bn_banded(params[0], W)
    (B2, c2) = _fold_conv_bn_banded(params[1], W)
    sdn = jnp.asarray(np.eye(H, k=-1, dtype=np.float32))    # row h <- row h-1
    sup = jnp.asarray(np.eye(H, k=1, dtype=np.float32))     # row h <- row h+1
    return dict(sdn=sdn, sup=sup, B1=B1, c1=c1, B2=B2, c2=c2)


# ---------------------------------------------------------------------------
# inconv forward (Pallas) and a pure-JAX reference
# ---------------------------------------------------------------------------
def inconv_forward(x_nchw, folded):
    N, Cin, H, W = x_nchw.shape
    WCout = folded["B2"].shape[2]
    Cout = WCout // W
    # NCHW -> NHWC -> row-flattened (N, H, W*Cin); the reshape is a free bitcast.
    x_rows = jnp.transpose(x_nchw, (0, 2, 3, 1)).reshape(N, H, W * Cin)
    y_rows = _double_conv_pallas(x_rows, folded["sdn"], folded["sup"],
                                 folded["B1"], folded["c1"],
                                 folded["B2"], folded["c2"])
    y = y_rows.reshape(N, H, W, Cout)                       # free bitcast back
    return jnp.transpose(y, (0, 3, 1, 2))                   # NHWC -> NCHW


def inconv_forward_ref(x_nchw, params):
    x = x_nchw
    for p in params:
        y = lax.conv_general_dilated(
            x, p["w"], (1, 1), ((1, 1), (1, 1)),
            dimension_numbers=("NCHW", "OIHW", "NCHW"))
        y = y + p["b"][None, :, None, None]
        y = (p["gamma"][None, :, None, None]
             * (y - p["mean"][None, :, None, None])
             / jnp.sqrt(p["var"][None, :, None, None] + _BN_EPS)
             + p["beta"][None, :, None, None])
        x = jnp.maximum(y, 0.0)
    return x


# ---------------------------------------------------------------------------
# Main
# ---------------------------------------------------------------------------
if __name__ == "__main__":
    key = jax.random.PRNGKey(0)
    kx, kp = jax.random.split(key)

    N, in_ch, out_ch, H, W = 2, 4, 8, 16, 16
    x = jax.random.normal(kx, (N, in_ch, H, W), jnp.float32)   # NCHW, like PyTorch
    params = init_inconv_params(kp, in_ch, out_ch)
    folded = fold_inconv_params(params, H, W)

    out = jax.block_until_ready(inconv_forward(x, folded))
    assert out.shape == (N, out_ch, H, W), out.shape

    ref = jax.block_until_ready(inconv_forward_ref(x, params))
    np.testing.assert_allclose(np.asarray(out), np.asarray(ref),
                               rtol=1e-4, atol=2e-4)

    print("KERNEL_OK")
</pallas_src>

<mosaic_0001>
module attributes {stable_mosaic.version = 11 : i64} {
  func.func @_double_conv_kernel(%arg0: i32, %arg1: memref<1x16x64xf32, #tpu.memory_space<vmem>>, %arg2: memref<16x16xf32, #tpu.memory_space<vmem>>, %arg3: memref<16x16xf32, #tpu.memory_space<vmem>>, %arg4: memref<3x64x128xf32, #tpu.memory_space<vmem>>, %arg5: memref<1x128xf32, #tpu.memory_space<vmem>>, %arg6: memref<3x128x128xf32, #tpu.memory_space<vmem>>, %arg7: memref<1x128xf32, #tpu.memory_space<vmem>>, %arg8: memref<1x16x128xf32, #tpu.memory_space<vmem>>) attributes {dimension_semantics = [#tpu.dimension_semantics<parallel>], iteration_bounds = array<i64: 2>, scalar_prefetch = 0 : i64, scratch_operands = 0 : i64, tpu.core_type = #tpu.core_type<tc>, window_params = [{transform_indices = @transform_0, window_bounds = array<i64: 1, 16, 64>}, {pipeline_mode = #tpu.pipeline_mode<synchronous>, transform_indices = @transform_1, window_bounds = array<i64: 16, 16>}, {pipeline_mode = #tpu.pipeline_mode<synchronous>, transform_indices = @transform_2, window_bounds = array<i64: 16, 16>}, {pipeline_mode = #tpu.pipeline_mode<synchronous>, transform_indices = @transform_3, window_bounds = array<i64: 3, 64, 128>}, {pipeline_mode = #tpu.pipeline_mode<synchronous>, transform_indices = @transform_4, window_bounds = array<i64: 1, 128>}, {pipeline_mode = #tpu.pipeline_mode<synchronous>, transform_indices = @transform_5, window_bounds = array<i64: 3, 128, 128>}, {pipeline_mode = #tpu.pipeline_mode<synchronous>, transform_indices = @transform_6, window_bounds = array<i64: 1, 128>}, {transform_indices = @transform_7, window_bounds = array<i64: 1, 16, 128>}]} {
    %c0 = arith.constant 0 : index
    %c0_0 = arith.constant 0 : index
    %0 = vector.load %arg2[%c0, %c0_0] : memref<16x16xf32, #tpu.memory_space<vmem>>, vector<16x16xf32>
    %c0_1 = arith.constant 0 : index
    %c0_2 = arith.constant 0 : index
    %1 = vector.load %arg3[%c0_1, %c0_2] : memref<16x16xf32, #tpu.memory_space<vmem>>, vector<16x16xf32>
    %c0_3 = arith.constant 0 : index
    %c0_4 = arith.constant 0 : index
    %c0_5 = arith.constant 0 : index
    %2 = vector.load %arg1[%c0_3, %c0_4, %c0_5] : memref<1x16x64xf32, #tpu.memory_space<vmem>>, vector<1x16x64xf32>
    %3 = vector.shape_cast %2 : vector<1x16x64xf32> to vector<16x64xf32>
    %cst = arith.constant dense<0.000000e+00> : vector<16x64xf32>
    %4 = tpu.matmul %0, %3, %cst {dimension_numbers = #tpu.dot_dimension_numbers<[1], [0], [0], [1], [0, 0, 1, 1], [], []>} : vector<16x16xf32>, vector<16x64xf32>, vector<16x64xf32> -> vector<16x64xf32>
    %cst_6 = arith.constant dense<0.000000e+00> : vector<16x64xf32>
    %5 = tpu.matmul %1, %3, %cst_6 {dimension_numbers = #tpu.dot_dimension_numbers<[1], [0], [0], [1], [0, 0, 1, 1], [], []>} : vector<16x16xf32>, vector<16x64xf32>, vector<16x64xf32> -> vector<16x64xf32>
    %c0_7 = arith.constant 0 : index
    %c0_8 = arith.constant 0 : index
    %c0_9 = arith.constant 0 : index
    %6 = vector.load %arg4[%c0_7, %c0_8, %c0_9] : memref<3x64x128xf32, #tpu.memory_space<vmem>>, vector<1x64x128xf32>
    %7 = vector.shape_cast %6 : vector<1x64x128xf32> to vector<64x128xf32>
    %cst_10 = arith.constant dense<0.000000e+00> : vector<16x128xf32>
    %8 = tpu.matmul %4, %7, %cst_10 {dimension_numbers = #tpu.dot_dimension_numbers<[1], [0], [0], [1], [0, 0, 1, 1], [], []>} : vector<16x64xf32>, vector<64x128xf32>, vector<16x128xf32> -> vector<16x128xf32>
    %c1 = arith.constant 1 : index
    %c0_11 = arith.constant 0 : index
    %c0_12 = arith.constant 0 : index
    %9 = vector.load %arg4[%c1, %c0_11, %c0_12] : memref<3x64x128xf32, #tpu.memory_space<vmem>>, vector<1x64x128xf32>
    %10 = vector.shape_cast %9 : vector<1x64x128xf32> to vector<64x128xf32>
    %cst_13 = arith.constant dense<0.000000e+00> : vector<16x128xf32>
    %11 = tpu.matmul %3, %10, %cst_13 {dimension_numbers = #tpu.dot_dimension_numbers<[1], [0], [0], [1], [0, 0, 1, 1], [], []>} : vector<16x64xf32>, vector<64x128xf32>, vector<16x128xf32> -> vector<16x128xf32>
    %12 = arith.addf %8, %11 : vector<16x128xf32>
    %c2 = arith.constant 2 : index
    %c0_14 = arith.constant 0 : index
    %c0_15 = arith.constant 0 : index
    %13 = vector.load %arg4[%c2, %c0_14, %c0_15] : memref<3x64x128xf32, #tpu.memory_space<vmem>>, vector<1x64x128xf32>
    %14 = vector.shape_cast %13 : vector<1x64x128xf32> to vector<64x128xf32>
    %cst_16 = arith.constant dense<0.000000e+00> : vector<16x128xf32>
    %15 = tpu.matmul %5, %14, %cst_16 {dimension_numbers = #tpu.dot_dimension_numbers<[1], [0], [0], [1], [0, 0, 1, 1], [], []>} : vector<16x64xf32>, vector<64x128xf32>, vector<16x128xf32> -> vector<16x128xf32>
    %16 = arith.addf %12, %15 : vector<16x128xf32>
    %c0_17 = arith.constant 0 : index
    %c0_18 = arith.constant 0 : index
    %17 = vector.load %arg5[%c0_17, %c0_18] : memref<1x128xf32, #tpu.memory_space<vmem>>, vector<1x128xf32>
    %18 = vector.broadcast %17 : vector<1x128xf32> to vector<16x128xf32>
    %19 = arith.addf %16, %18 : vector<16x128xf32>
    %cst_19 = arith.constant 0.000000e+00 : f32
    %20 = vector.broadcast %cst_19 : f32 to vector<16x128xf32>
    %21 = arith.maximumf %19, %20 : vector<16x128xf32>
    %cst_20 = arith.constant dense<0.000000e+00> : vector<16x128xf32>
    %22 = tpu.matmul %0, %21, %cst_20 {dimension_numbers = #tpu.dot_dimension_numbers<[1], [0], [0], [1], [0, 0, 1, 1], [], []>} : vector<16x16xf32>, vector<16x128xf32>, vector<16x128xf32> -> vector<16x128xf32>
    %cst_21 = arith.constant dense<0.000000e+00> : vector<16x128xf32>
    %23 = tpu.matmul %1, %21, %cst_21 {dimension_numbers = #tpu.dot_dimension_numbers<[1], [0], [0], [1], [0, 0, 1, 1], [], []>} : vector<16x16xf32>, vector<16x128xf32>, vector<16x128xf32> -> vector<16x128xf32>
    %c0_22 = arith.constant 0 : index
    %c0_23 = arith.constant 0 : index
    %c0_24 = arith.constant 0 : index
    %24 = vector.load %arg6[%c0_22, %c0_23, %c0_24] : memref<3x128x128xf32, #tpu.memory_space<vmem>>, vector<1x128x128xf32>
    %25 = vector.shape_cast %24 : vector<1x128x128xf32> to vector<128x128xf32>
    %cst_25 = arith.constant dense<0.000000e+00> : vector<16x128xf32>
    %26 = tpu.matmul %22, %25, %cst_25 {dimension_numbers = #tpu.dot_dimension_numbers<[1], [0], [0], [1], [0, 0, 1, 1], [], []>} : vector<16x128xf32>, vector<128x128xf32>, vector<16x128xf32> -> vector<16x128xf32>
    %c1_26 = arith.constant 1 : index
    %c0_27 = arith.constant 0 : index
    %c0_28 = arith.constant 0 : index
    %27 = vector.load %arg6[%c1_26, %c0_27, %c0_28] : memref<3x128x128xf32, #tpu.memory_space<vmem>>, vector<1x128x128xf32>
    %28 = vector.shape_cast %27 : vector<1x128x128xf32> to vector<128x128xf32>
    %cst_29 = arith.constant dense<0.000000e+00> : vector<16x128xf32>
    %29 = tpu.matmul %21, %28, %cst_29 {dimension_numbers = #tpu.dot_dimension_numbers<[1], [0], [0], [1], [0, 0, 1, 1], [], []>} : vector<16x128xf32>, vector<128x128xf32>, vector<16x128xf32> -> vector<16x128xf32>
    %30 = arith.addf %26, %29 : vector<16x128xf32>
    %c2_30 = arith.constant 2 : index
    %c0_31 = arith.constant 0 : index
    %c0_32 = arith.constant 0 : index
    %31 = vector.load %arg6[%c2_30, %c0_31, %c0_32] : memref<3x128x128xf32, #tpu.memory_space<vmem>>, vector<1x128x128xf32>
    %32 = vector.shape_cast %31 : vector<1x128x128xf32> to vector<128x128xf32>
    %cst_33 = arith.constant dense<0.000000e+00> : vector<16x128xf32>
    %33 = tpu.matmul %23, %32, %cst_33 {dimension_numbers = #tpu.dot_dimension_numbers<[1], [0], [0], [1], [0, 0, 1, 1], [], []>} : vector<16x128xf32>, vector<128x128xf32>, vector<16x128xf32> -> vector<16x128xf32>
    %34 = arith.addf %30, %33 : vector<16x128xf32>
    %c0_34 = arith.constant 0 : index
    %c0_35 = arith.constant 0 : index
    %35 = vector.load %arg7[%c0_34, %c0_35] : memref<1x128xf32, #tpu.memory_space<vmem>>, vector<1x128xf32>
    %36 = vector.broadcast %35 : vector<1x128xf32> to vector<16x128xf32>
    %37 = arith.addf %34, %36 : vector<16x128xf32>
    %cst_36 = arith.constant 0.000000e+00 : f32
    %38 = vector.broadcast %cst_36 : f32 to vector<16x128xf32>
    %39 = arith.maximumf %37, %38 : vector<16x128xf32>
    %c0_37 = arith.constant 0 : index
    %c0_38 = arith.constant 0 : index
    %c0_39 = arith.constant 0 : index
    %40 = vector.load %arg8[%c0_37, %c0_38, %c0_39] : memref<1x16x128xf32, #tpu.memory_space<vmem>>, vector<1x16x128xf32>
    %41 = vector.shape_cast %40 : vector<1x16x128xf32> to vector<16x128xf32>
    %42 = vector.shape_cast %39 : vector<16x128xf32> to vector<1x16x128xf32>
    tpu.vector_store %arg8[%c0_37, %c0_38, %c0_39], %42 {strides = array<i32>} : memref<1x16x128xf32, #tpu.memory_space<vmem>>, vector<1x16x128xf32>,
    return
  }
  func.func @transform_0(%arg0: i32) -> (i32, i32, i32) {
    %c0_i32 = arith.constant 0 : i32
    %c0_i32_0 = arith.constant 0 : i32
    %c0_i32_1 = arith.constant 0 : i32
    return %arg0, %c0_i32, %c0_i32_0 : i32, i32, i32
  }
  func.func @transform_1(%arg0: i32) -> (i32, i32) {
    %c0_i32 = arith.constant 0 : i32
    %c0_i32_0 = arith.constant 0 : i32
    %c0_i32_1 = arith.constant 0 : i32
    return %c0_i32, %c0_i32_0 : i32, i32
  }
  func.func @transform_2(%arg0: i32) -> (i32, i32) {
    %c0_i32 = arith.constant 0 : i32
    %c0_i32_0 = arith.constant 0 : i32
    %c0_i32_1 = arith.constant 0 : i32
    return %c0_i32, %c0_i32_0 : i32, i32
  }
  func.func @transform_3(%arg0: i32) -> (i32, i32, i32) {
    %c0_i32 = arith.constant 0 : i32
    %c0_i32_0 = arith.constant 0 : i32
    %c0_i32_1 = arith.constant 0 : i32
    %c0_i32_2 = arith.constant 0 : i32
    return %c0_i32, %c0_i32_0, %c0_i32_1 : i32, i32, i32
  }
  func.func @transform_4(%arg0: i32) -> (i32, i32) {
    %c0_i32 = arith.constant 0 : i32
    %c0_i32_0 = arith.constant 0 : i32
    %c0_i32_1 = arith.constant 0 : i32
    return %c0_i32, %c0_i32_0 : i32, i32
  }
  func.func @transform_5(%arg0: i32) -> (i32, i32, i32) {
    %c0_i32 = arith.constant 0 : i32
    %c0_i32_0 = arith.constant 0 : i32
    %c0_i32_1 = arith.constant 0 : i32
    %c0_i32_2 = arith.constant 0 : i32
    return %c0_i32, %c0_i32_0, %c0_i32_1 : i32, i32, i32
  }
  func.func @transform_6(%arg0: i32) -> (i32, i32) {
    %c0_i32 = arith.constant 0 : i32
    %c0_i32_0 = arith.constant 0 : i32
    %c0_i32_1 = arith.constant 0 : i32
    return %c0_i32, %c0_i32_0 : i32, i32
  }
  func.func @transform_7(%arg0: i32) -> (i32, i32, i32) {
    %c0_i32 = arith.constant 0 : i32
    %c0_i32_0 = arith.constant 0 : i32
    %c0_i32_1 = arith.constant 0 : i32
    return %arg0, %c0_i32, %c0_i32_0 : i32, i32, i32
  }
}

</mosaic_0001>

<llo_original>
// kernel: tpu_custom_call.1
$region0: #{tpu_custom_call.1}
  #allocation0 [shape = 'u32[]', space=smem, size = 0x4, offset = 0x4, fixed_abs, tag = 'smem constant byte address 0x4 - core index']
  #allocation1 [shape = 'u32[72,128]{1,0:T(1,128)}', space=vmem, size = 0x9000, scoped, tag = 'internal scratch']
  %s0 = inlined_call_operand.hbm [shape: f32[2,16,64], index: 0, kind: input, shape index: {}]
  %s1 = inlined_call_operand.hbm [shape: f32[16,16], index: 1, kind: input, shape index: {}]
  %s2 = inlined_call_operand.hbm [shape: f32[16,16], index: 2, kind: input, shape index: {}]
  %s3 = inlined_call_operand.hbm [shape: f32[3,64,128], index: 3, kind: input, shape index: {}]
  %s4 = inlined_call_operand.vmem [shape: f32[1,128], index: 4, kind: input, shape index: {}]
  %s5 = inlined_call_operand.hbm [shape: f32[3,128,128], index: 5, kind: input, shape index: {}]
  %s6 = inlined_call_operand.vmem [shape: f32[1,128], index: 6, kind: input, shape index: {}]
  %s7 = inlined_call_operand.hbm [shape: f32[2,16,128], index: 7, kind: output, shape index: {}]
  %s8 = sld [smem:[#allocation0]]
  $region81: #{tpu_custom_call.1} parent=0
    _
  %s10 = ssub.s32 1, %s8
  %s11 = scalar_select 0, %s10, %s8
  $region1: #{tpu_custom_call.1} parent=0
    #allocation2 [shape = 'u8[16384]{0}', space=vmem, size = 0x4000, scoped, tag = 'input window, operand 0']
    #allocation3 [shape = 's32[2]{0}', space=sflag, size = 0x8, scoped, tag = 'scoped memory for tpu_custom_call.1']
    #allocation4 [shape = 's32[2]{0}', space=sflag, size = 0x8, scoped, tag = 'scoped memory for tpu_custom_call.1']
    #allocation5 [shape = 'u8[8192]{0}', space=vmem, size = 0x2000, scoped, tag = 'input window, operand 1, single buffered']
    #allocation6 [shape = 's32[1]{0}', space=sflag, size = 0x4, scoped, tag = 'scoped memory for tpu_custom_call.1']
    #allocation7 [shape = 'u8[8192]{0}', space=vmem, size = 0x2000, scoped, tag = 'input window, operand 2, single buffered']
    #allocation8 [shape = 'u8[98304]{0}', space=vmem, size = 0x18000, scoped, tag = 'input window, operand 3, single buffered']
    #allocation9 [shape = 's32[1]{0}', space=sflag, size = 0x4, scoped, tag = 'scoped memory for tpu_custom_call.1']
    #allocation10 [shape = 'u8[196608]{0}', space=vmem, size = 0x30000, scoped, tag = 'input window, operand 5, single buffered']
    #allocation11 [shape = 'u8[16384]{0}', space=vmem, size = 0x4000, scoped, tag = 'output window, operand 0']
    %12 = vsyncpa [#allocation3], 0
    %s13 = scalar_lea.sflag [#allocation3], 1
    %14 = vsyncpa %s13, 0
    %15 = vsyncpa [#allocation6], 0
    %16 = vsyncpa [#allocation9], 0
    %17 = vsyncpa [#allocation4], 0
    %s18 = scalar_lea.sflag [#allocation4], 1
    %19 = vsyncpa %s18, 0
    loop: start=0, step=1, limit=4
    $region2: #{tpu_custom_call.1} parent=1 // loop_pre_header
      _
    $region3: #{tpu_custom_call.1} parent=1 // loop_header
      %s21 = sphi 0, %s25
      %p22 = scmp.ge.s32.totalorder %s21, 4
      %s31 = sphi 0, %s33
      %s34 = sphi 0, %s31
      %s35 = sphi 0, %s34
      %s51 = sphi 0, %s35
      %s55 = sphi 0, %s55
      %s57 = sphi 0, %s55
      %s58 = sphi 0, %s57
      %s72 = sphi 0, %s58
      %s76 = sphi 0, %s76
      %s78 = sphi 0, %s76
      %s79 = sphi 0, %s78
      %s93 = sphi 0, %s79
      %s97 = sphi 0, %s97
      %s99 = sphi 0, %s97
      %s100 = sphi 0, %s99
      %s114 = sphi 0, %s100
      %s118 = sphi 0, %s118
      %s120 = sphi 0, %s118
      %s121 = sphi 0, %s120
      %s135 = sphi 0, %s121
      %s139 = sphi 0, %s139
      %s141 = sphi 0, %s139
      %s142 = sphi 0, %s141
      %s156 = sphi 0, %s142
      %s160 = sphi 0, %s160
      %s162 = sphi 0, %s160
      %s163 = sphi 0, %s162
      %s177 = sphi 0, %s163
      %s183 = sphi 0, %s185
      %s186 = sphi 0, %s183
      %s187 = sphi 0, %s186
      %s203 = sphi 0, %s187
    $region4: #{tpu_custom_call.1} parent=1 // loop_header_branch
      %24 = sbr.rel (%p22) target = $region8
    $region5: #{tpu_custom_call.1} parent=1 // loop_body
      %s26 = ssub.s32 %s21, 1
      %s27 = ssub.s32 %s21, 2
      %s28 = sadd.s32 %s21, 1
      %s29 = ssub.s32 %s21, %s28
      %p30 = scmp.eq.s32.totalorder %s29, 0
      %s32 = sadd.s32 %s31, 1
      %s33 = scalar_select %p30, %s31, %s32
      %p36 = pneg %p30
      %p37 = scmp.eq.s32.totalorder %s21, 1
      %p38 = por %p36, %p37
      %p39 = scmp.ne.s32.totalorder %s31, %s34
      %p40 = scmp.eq.s32.totalorder %s21, 0
      %p41 = por %p39, %p40
      %p42 = scmp.ne.s32.totalorder %s31, %s34
      %p43 = scmp.eq.s32.totalorder %s26, 1
      %p44 = por %p42, %p43
      %p45 = scmp.ne.s32.totalorder %s34, %s35
      %p46 = scmp.eq.s32.totalorder %s26, 0
      %p47 = por %p45, %p46
      %p48 = scmp.ne.s32.totalorder %s34, %s35
      %p49 = scmp.eq.s32.totalorder %s27, 1
      %p50 = por %p48, %p49
      %p52 = scmp.ne.s32.totalorder %s35, %s51
      %p53 = scmp.eq.s32.totalorder %s27, 0
      %p54 = por %p52, %p53
      %s56 = sadd.s32 %s55, 1
      %p59 = scmp.eq.s32.totalorder %s21, 1
      %p60 = scmp.ne.s32.totalorder %s55, %s57
      %p61 = scmp.eq.s32.totalorder %s21, 0
      %p62 = por %p60, %p61
      %p63 = scmp.ne.s32.totalorder %s55, %s57
      %p64 = scmp.eq.s32.totalorder %s26, 1
      %p65 = por %p63, %p64
      %p66 = scmp.ne.s32.totalorder %s57, %s58
      %p67 = scmp.eq.s32.totalorder %s26, 0
      %p68 = por %p66, %p67
      %p69 = scmp.ne.s32.totalorder %s57, %s58
      %p70 = scmp.eq.s32.totalorder %s27, 1
      %p71 = por %p69, %p70
      %p73 = scmp.ne.s32.totalorder %s58, %s72
      %p74 = scmp.eq.s32.totalorder %s27, 0
      %p75 = por %p73, %p74
      %s77 = sadd.s32 %s76, 1
      %p80 = scmp.eq.s32.totalorder %s21, 1
      %p81 = scmp.ne.s32.totalorder %s76, %s78
      %p82 = scmp.eq.s32.totalorder %s21, 0
      %p83 = por %p81, %p82
      %p84 = scmp.ne.s32.totalorder %s76, %s78
      %p85 = scmp.eq.s32.totalorder %s26, 1
      %p86 = por %p84, %p85
      %p87 = scmp.ne.s32.totalorder %s78, %s79
      %p88 = scmp.eq.s32.totalorder %s26, 0
      %p89 = por %p87, %p88
      %p90 = scmp.ne.s32.totalorder %s78, %s79
      %p91 = scmp.eq.s32.totalorder %s27, 1
      %p92 = por %p90, %p91
      %p94 = scmp.ne.s32.totalorder %s79, %s93
      %p95 = scmp.eq.s32.totalorder %s27, 0
      %p96 = por %p94, %p95
      %s98 = sadd.s32 %s97, 1
      %p101 = scmp.eq.s32.totalorder %s21, 1
      %p102 = scmp.ne.s32.totalorder %s97, %s99
      %p103 = scmp.eq.s32.totalorder %s21, 0
      %p104 = por %p102, %p103
      %p105 = scmp.ne.s32.totalorder %s97, %s99
      %p106 = scmp.eq.s32.totalorder %s26, 1
      %p107 = por %p105, %p106
      %p108 = scmp.ne.s32.totalorder %s99, %s100
      %p109 = scmp.eq.s32.totalorder %s26, 0
      %p110 = por %p108, %p109
      %p111 = scmp.ne.s32.totalorder %s99, %s100
      %p112 = scmp.eq.s32.totalorder %s27, 1
      %p113 = por %p111, %p112
      %p115 = scmp.ne.s32.totalorder %s100, %s114
      %p116 = scmp.eq.s32.totalorder %s27, 0
      %p117 = por %p115, %p116
      %s119 = sadd.s32 %s118, 1
      %p122 = scmp.eq.s32.totalorder %s21, 1
      %p123 = scmp.ne.s32.totalorder %s118, %s120
      %p124 = scmp.eq.s32.totalorder %s21, 0
      %p125 = por %p123, %p124
      %p126 = scmp.ne.s32.totalorder %s118, %s120
      %p127 = scmp.eq.s32.totalorder %s26, 1
      %p128 = por %p126, %p127
      %p129 = scmp.ne.s32.totalorder %s120, %s121
      %p130 = scmp.eq.s32.totalorder %s26, 0
      %p131 = por %p129, %p130
      %p132 = scmp.ne.s32.totalorder %s120, %s121
      %p133 = scmp.eq.s32.totalorder %s27, 1
      %p134 = por %p132, %p133
      %p136 = scmp.ne.s32.totalorder %s121, %s135
      %p137 = scmp.eq.s32.totalorder %s27, 0
      %p138 = por %p136, %p137
      %s140 = sadd.s32 %s139, 1
      %p143 = scmp.eq.s32.totalorder %s21, 1
      %p144 = scmp.ne.s32.totalorder %s139, %s141
      %p145 = scmp.eq.s32.totalorder %s21, 0
      %p146 = por %p144, %p145
      %p147 = scmp.ne.s32.totalorder %s139, %s141
      %p148 = scmp.eq.s32.totalorder %s26, 1
      %p149 = por %p147, %p148
      %p150 = scmp.ne.s32.totalorder %s141, %s142
      %p151 = scmp.eq.s32.totalorder %s26, 0
      %p152 = por %p150, %p151
      %p153 = scmp.ne.s32.totalorder %s141, %s142
      %p154 = scmp.eq.s32.totalorder %s27, 1
      %p155 = por %p153, %p154
      %p157 = scmp.ne.s32.totalorder %s142, %s156
      %p158 = scmp.eq.s32.totalorder %s27, 0
      %p159 = por %p157, %p158
      %s161 = sadd.s32 %s160, 1
      %p164 = scmp.eq.s32.totalorder %s21, 1
      %p165 = scmp.ne.s32.totalorder %s160, %s162
      %p166 = scmp.eq.s32.totalorder %s21, 0
      %p167 = por %p165, %p166
      %p168 = scmp.ne.s32.totalorder %s160, %s162
      %p169 = scmp.eq.s32.totalorder %s26, 1
      %p170 = por %p168, %p169
      %p171 = scmp.ne.s32.totalorder %s162, %s163
      %p172 = scmp.eq.s32.totalorder %s26, 0
      %p173 = por %p171, %p172
      %p174 = scmp.ne.s32.totalorder %s162, %s163
      %p175 = scmp.eq.s32.totalorder %s27, 1
      %p176 = por %p174, %p175
      %p178 = scmp.ne.s32.totalorder %s163, %s177
      %p179 = scmp.eq.s32.totalorder %s27, 0
      %p180 = por %p178, %p179
      %s181 = ssub.s32 %s21, %s28
      %p182 = scmp.eq.s32.totalorder %s181, 0
      %s184 = sadd.s32 %s183, 1
      %s185 = scalar_select %p182, %s183, %s184
      %p188 = pneg %p182
      %p189 = scmp.eq.s32.totalorder %s21, 1
      %p190 = por %p188, %p189
      %p191 = scmp.ne.s32.totalorder %s183, %s186
      %p192 = scmp.eq.s32.totalorder %s21, 0
      %p193 = por %p191, %p192
      %p194 = scmp.ne.s32.totalorder %s183, %s186
      %p195 = scmp.eq.s32.totalorder %s26, 1
      %p196 = por %p194, %p195
      %p197 = scmp.ne.s32.totalorder %s186, %s187
      %p198 = scmp.eq.s32.totalorder %s26, 0
      %p199 = por %p197, %p198
      %p200 = scmp.ne.s32.totalorder %s186, %s187
      %p201 = scmp.eq.s32.totalorder %s27, 1
      %p202 = por %p200, %p201
      %p204 = scmp.ne.s32.totalorder %s187, %s203
      %p205 = scmp.eq.s32.totalorder %s27, 0
      %p206 = por %p204, %p205
      %p207 = scmp.le.s32.totalorder 1, %s21
      %p208 = scmp.lt.s32.totalorder %s21, 3
      %p209 = pnand %p207, %p208
      %p210 = pneg %p209
      // Predicated region
      $region9: #{tpu_custom_call.1} parent=5 // pred_check
        _
      $region10: #{tpu_custom_call.1} parent=5 // pred_check_branch
        %212 = sbr.rel (%p209) target = $region12
      $region11: #{tpu_custom_call.1} parent=5 // pred_region
        %s213 = ssub.s32 %s21, 1
        // Predicated region
        $region13: #{tpu_custom_call.1} parent=11 // pred_check
          %p214 = pneg %p68
        $region14: #{tpu_custom_call.1} parent=11 // pred_check_branch
          %216 = sbr.rel (%p214) target = $region16
        $region15: #{tpu_custom_call.1} parent=11 // pred_region
          %218 = vsyncadd [#allocation6], 0
          %s219 = sshll.u32 %s1, 4
          %s220 = int_to_ptr.hbm [resolvable:$true] %s219
          %s221 = sshll.u32 [#allocation5], 4
          %s222 = int_to_ptr.vmem [resolvable:$true] %s221
          %227 = dma.hbm_to_vmem [thread:$0]  %s220, 256, %s222, [#allocation6], 128, 128, 8
        $region16: #{tpu_custom_call.1} parent=11 // pred_fallthru
          _
        // Predicated region
        $region17: #{tpu_custom_call.1} parent=11 // pred_check
          %p228 = pneg %p89
        $region18: #{tpu_custom_call.1} parent=11 // pred_check_branch
          %230 = sbr.rel (%p228) target = $region20
        $region19: #{tpu_custom_call.1} parent=11 // pred_region
          %232 = vsyncadd [#allocation6], 0
          %s233 = sshll.u32 %s2, 4
          %s234 = int_to_ptr.hbm [resolvable:$true] %s233
          %s235 = sshll.u32 [#allocation7], 4
          %s236 = int_to_ptr.vmem [resolvable:$true] %s235
          %241 = dma.hbm_to_vmem [thread:$0]  %s234, 256, %s236, [#allocation6], 128, 128, 8
        $region20: #{tpu_custom_call.1} parent=11 // pred_fallthru
          _
        // Predicated region
        $region21: #{tpu_custom_call.1} parent=11 // pred_check
          %p242 = pneg %p110
        $region22: #{tpu_custom_call.1} parent=11 // pred_check_branch
          %244 = sbr.rel (%p242) target = $region24
        $region23: #{tpu_custom_call.1} parent=11 // pred_region
          %246 = vsyncadd [#allocation9], 0
          %s247 = sshll.u32 %s3, 4
          %s248 = int_to_ptr.hbm [resolvable:$true] %s247
          %s249 = sshll.u32 [#allocation8], 4
          %s250 = int_to_ptr.vmem [resolvable:$true] %s249
          %255 = dma.hbm_to_vmem [thread:$0]  %s248, 3072, %s250, [#allocation9], 128, 128, 8
        $region24: #{tpu_custom_call.1} parent=11 // pred_fallthru
          _
        // Predicated region
        $region25: #{tpu_custom_call.1} parent=11 // pred_check
          %p256 = pneg %p131
        $region26: #{tpu_custom_call.1} parent=11 // pred_check_branch
          %258 = sbr.rel (%p256) target = $region28
        $region27: #{tpu_custom_call.1} parent=11 // pred_region
          _
        $region28: #{tpu_custom_call.1} parent=11 // pred_fallthru
          _
        // Predicated region
        $region29: #{tpu_custom_call.1} parent=11 // pred_check
          %p259 = pneg %p152
        $region30: #{tpu_custom_call.1} parent=11 // pred_check_branch
          %261 = sbr.rel (%p259) target = $region32
        $region31: #{tpu_custom_call.1} parent=11 // pred_region
          %263 = vsyncadd [#allocation9], 0
          %s264 = sshll.u32 %s5, 4
          %s265 = int_to_ptr.hbm [resolvable:$true] %s264
          %s266 = sshll.u32 [#allocation10], 4
          %s267 = int_to_ptr.vmem [resolvable:$true] %s266
          %272 = dma.hbm_to_vmem [thread:$0]  %s265, 6144, %s267, [#allocation9], 128, 128, 8
        $region32: #{tpu_custom_call.1} parent=11 // pred_fallthru
          _
        // Predicated region
        $region33: #{tpu_custom_call.1} parent=11 // pred_check
          %p273 = pneg %p173
        $region34: #{tpu_custom_call.1} parent=11 // pred_check_branch
          %275 = sbr.rel (%p273) target = $region36
        $region35: #{tpu_custom_call.1} parent=11 // pred_region
          _
        $region36: #{tpu_custom_call.1} parent=11 // pred_fallthru
          _
      $region12: #{tpu_custom_call.1} parent=5 // pred_fallthru
        _
      %p276 = scmp.lt.s32.totalorder %s21, 2
      // Predicated region
      $region37: #{tpu_custom_call.1} parent=5 // pred_check
        %p277 = pneg %p276
      $region38: #{tpu_custom_call.1} parent=5 // pred_check_branch
        %279 = sbr.rel (%p277) target = $region40
      $region39: #{tpu_custom_call.1} parent=5 // pred_region
        // Predicated region
        $region41: #{tpu_custom_call.1} parent=39 // pred_check
          %p280 = pneg %p41
        $region42: #{tpu_custom_call.1} parent=39 // pred_check_branch
          %282 = sbr.rel (%p280) target = $region44
        $region43: #{tpu_custom_call.1} parent=39 // pred_region
          %s283 = sand.u32 %s31, 1
          %s284 = scalar_lea.sflag [#allocation3], %s283
          %s285 = sand.u32 %s31, 1
          %s286 = smul.addr %s285, 16
          %s287 = scalar_lea.vmem [#allocation2], %s286
          %289 = vsyncadd %s284, 0
          %s290 = smul.addr %s21, 2
          %s291 = smul.addr %s290, 8
          %s292 = scalar_lea.hbm %s0, %s291
          %s293 = sshll.u32 %s292, 4
          %s294 = int_to_ptr.hbm [resolvable:$true] %s293
          %s295 = sshll.u32 %s287, 4
          %s296 = int_to_ptr.vmem [resolvable:$true] %s295
          %301 = dma.hbm_to_vmem [thread:$0]  %s294, 256, %s296, %s284, 128, 128, 8
        $region44: #{tpu_custom_call.1} parent=39 // pred_fallthru
          _
      $region40: #{tpu_custom_call.1} parent=5 // pred_fallthru
        _
      %p302 = scmp.le.s32.totalorder 1, %s21
      %p303 = scmp.lt.s32.totalorder %s21, 3
      %p304 = pnand %p302, %p303
      %p305 = pneg %p304
      // Predicated region
      $region45: #{tpu_custom_call.1} parent=5 // pred_check
        _
      $region46: #{tpu_custom_call.1} parent=5 // pred_check_branch
        %307 = sbr.rel (%p304) target = $region48
      $region47: #{tpu_custom_call.1} parent=5 // pred_region
        %s308 = ssub.s32 %s21, 1
        %s309 = sand.u32 %s34, 1
        %s310 = scalar_lea.sflag [#allocation3], %s309
        %s311 = sand.u32 %s34, 1
        %s312 = smul.addr %s311, 16
        %s313 = scalar_lea.vmem [#allocation2], %s312
        // Predicated region
        $region49: #{tpu_custom_call.1} parent=47 // pred_check
          %p314 = pneg %p47
        $region50: #{tpu_custom_call.1} parent=47 // pred_check_branch
          %316 = sbr.rel (%p314) target = $region52
        $region51: #{tpu_custom_call.1} parent=47 // pred_region
          %318 = dma.done %s310, 256
        $region52: #{tpu_custom_call.1} parent=47 // pred_fallthru
          _
        // Predicated region
        $region53: #{tpu_custom_call.1} parent=47 // pred_check
          %p319 = pneg %p68
        $region54: #{tpu_custom_call.1} parent=47 // pred_check_branch
          %321 = sbr.rel (%p319) target = $region56
        $region55: #{tpu_custom_call.1} parent=47 // pred_region
          %323 = dma.done [#allocation6], 256
        $region56: #{tpu_custom_call.1} parent=47 // pred_fallthru
          _
        // Predicated region
        $region57: #{tpu_custom_call.1} parent=47 // pred_check
          %p324 = pneg %p89
        $region58: #{tpu_custom_call.1} parent=47 // pred_check_branch
          %326 = sbr.rel (%p324) target = $region60
        $region59: #{tpu_custom_call.1} parent=47 // pred_region
          %328 = dma.done [#allocation6], 256
        $region60: #{tpu_custom_call.1} parent=47 // pred_fallthru
          _
        // Predicated region
        $region61: #{tpu_custom_call.1} parent=47 // pred_check
          %p329 = pneg %p110
        $region62: #{tpu_custom_call.1} parent=47 // pred_check_branch
          %331 = sbr.rel (%p329) target = $region64
        $region63: #{tpu_custom_call.1} parent=47 // pred_region
          %333 = dma.done [#allocation9], 3072
        $region64: #{tpu_custom_call.1} parent=47 // pred_fallthru
          _
        // Predicated region
        $region65: #{tpu_custom_call.1} parent=47 // pred_check
          %p334 = pneg %p152
        $region66: #{tpu_custom_call.1} parent=47 // pred_check_branch
          %336 = sbr.rel (%p334) target = $region68
        $region67: #{tpu_custom_call.1} parent=47 // pred_region
          %338 = dma.done [#allocation9], 6144
        $region68: #{tpu_custom_call.1} parent=47 // pred_fallthru
          _
        %s339 = sand.u32 %s34, 1
        %s340 = scalar_lea.sflag [#allocation3], %s339
        %s341 = sand.u32 %s34, 1
        %s342 = smul.addr %s341, 16
        %s343 = scalar_lea.vmem [#allocation2], %s342
        %p344 = pneg %p47
        %p345 = pneg %p44
        %p346 = pneg %p68
        %p347 = pneg %p65
        %p348 = pneg %p89
        %p349 = pneg %p86
        %p350 = pneg %p110
        %p351 = pneg %p107
        %p352 = pneg %p131
        %p353 = pneg %p128
        %p354 = pneg %p152
        %p355 = pneg %p149
        %p356 = pneg %p173
        %p357 = pneg %p170
        %p358 = pneg %p199
        %p359 = pneg %p196
        %s360 = sand.u32 %s186, 1
        %s361 = scalar_lea.sflag [#allocation4], %s360
        %s362 = sand.u32 %s186, 1
        %s363 = smul.addr %s362, 16
        %s364 = scalar_lea.vmem [#allocation11], %s363
        %v365 = vld [vmem:[#allocation5] sm:$0xff]
        %v366 = vld [vmem:[#allocation5 + $0x8] sm:$0xff]
        %v367 = vld [vmem:[#allocation7] sm:$0xff]
        %v368 = vld [vmem:[#allocation7 + $0x8] sm:$0xff]
        %v369 = vld [vmem:[%s313] sm:$0xff]
        %v370 = vld [vmem:[%s313 + $0x8] sm:$0xff]
        %vm371 = vcmask 130048
        %v373 = vsel %vm371, %v365, 0
        %v376 = vsel %vm371, %v366, 0
        %378 = vmatpush.msra.mxu0 0.0
        %379 = vmatpush.msra.mxu0 0.0
        %380 = vmatpush.msra.mxu0 0.0
        %381 = vmatpush.msra.mxu0 0.0
        %382 = vmatpush.msra.mxu0 0.0
        %383 = vmatpush.msra.mxu0 0.0
        %384 = vmatpush.msra.mxu0 0.0
        %385 = vmatpush.msra.mxu0 0.0
        %386 = vmatpush.msra.mxu0 0.0
        %387 = vmatpush.msra.mxu0 0.0
        %388 = vmatpush.msra.mxu0 0.0
        %389 = vmatpush.msra.mxu0 0.0
        %390 = vmatpush.msra.mxu0 0.0
        %391 = vmatpush.msra.mxu0 0.0
        %392 = vmatpush.msra.mxu0 %v370
        %393 = vmatpush.msra.mxu0 %v369
        %394 = vmatmul.f32.gmra.mxu0 %v373
        %v395 = vpop.f32.mrf.mxu0
        %v396 = vadd.f32 0.0, %v395
        %397 = vmatmul.f32.gmra.mxu0 %v376
        %v398 = vpop.f32.mrf.mxu0
        %v399 = vadd.f32 0.0, %v398
        %400 = vdwg.mxu0
        %v402 = vsel %vm371, %v367, 0
        %v405 = vsel %vm371, %v368, 0
        %407 = vmatpush.msra.mxu0 0.0
        %408 = vmatpush.msra.mxu0 0.0
        %409 = vmatpush.msra.mxu0 0.0
        %410 = vmatpush.msra.mxu0 0.0
        %411 = vmatpush.msra.mxu0 0.0
        %412 = vmatpush.msra.mxu0 0.0
        %413 = vmatpush.msra.mxu0 0.0
        %414 = vmatpush.msra.mxu0 0.0
        %415 = vmatpush.msra.mxu0 0.0
        %416 = vmatpush.msra.mxu0 0.0
        %417 = vmatpush.msra.mxu0 0.0
        %418 = vmatpush.msra.mxu0 0.0
        %419 = vmatpush.msra.mxu0 0.0
        %420 = vmatpush.msra.mxu0 0.0
        %421 = vmatpush.msra.mxu0 %v370
        %422 = vmatpush.msra.mxu0 %v369
        %423 = vmatmul.f32.gmra.mxu0 %v402
        %v424 = vpop.f32.mrf.mxu0
        %v425 = vadd.f32 0.0, %v424
        %426 = vmatmul.f32.gmra.mxu0 %v405
        %v427 = vpop.f32.mrf.mxu0
        %v428 = vadd.f32 0.0, %v427
        %429 = vdwg.mxu0
        %v430 = vld [vmem:[#allocation8] sm:$0xff]
        %v431 = vld [vmem:[#allocation8 + $0x8] sm:$0xff]
        %v432 = vld [vmem:[#allocation8 + $0x10] sm:$0xff]
        %v433 = vld [vmem:[#allocation8 + $0x18] sm:$0xff]
        %v434 = vld [vmem:[#allocation8 + $0x20] sm:$0xff]
        %v435 = vld [vmem:[#allocation8 + $0x28] sm:$0xff]
        %v436 = vld [vmem:[#allocation8 + $0x30] sm:$0xff]
        %v437 = vld [vmem:[#allocation8 + $0x38] sm:$0xff]
        %s438 = scalar_lea.vmem [#allocation8], 64
        %v439 = vld [vmem:[%s438] sm:$0xff]
        %v440 = vld [vmem:[%s438 + $0x8] sm:$0xff]
        %v441 = vld [vmem:[%s438 + $0x10] sm:$0xff]
        %v442 = vld [vmem:[%s438 + $0x18] sm:$0xff]
        %v443 = vld [vmem:[%s438 + $0x20] sm:$0xff]
        %v444 = vld [vmem:[%s438 + $0x28] sm:$0xff]
        %v445 = vld [vmem:[%s438 + $0x30] sm:$0xff]
        %v446 = vld [vmem:[%s438 + $0x38] sm:$0xff]
        %vm447 = vcmask 523264
        %v449 = vsel %vm447, %v369, 0
        %v452 = vsel %vm447, %v370, 0
        %454 = vmatpush.msra.mxu0 0.0
        %455 = vmatpush.msra.mxu0 0.0
        %456 = vmatpush.msra.mxu0 0.0
        %457 = vmatpush.msra.mxu0 0.0
        %458 = vmatpush.msra.mxu0 0.0
        %459 = vmatpush.msra.mxu0 0.0
        %460 = vmatpush.msra.mxu0 0.0
        %461 = vmatpush.msra.mxu0 0.0
        %462 = vmatpush.msra.mxu0 %v446
        %463 = vmatpush.msra.mxu0 %v445
        %464 = vmatpush.msra.mxu0 %v444
        %465 = vmatpush.msra.mxu0 %v443
        %466 = vmatpush.msra.mxu0 %v442
        %467 = vmatpush.msra.mxu0 %v441
        %468 = vmatpush.msra.mxu0 %v440
        %469 = vmatpush.msra.mxu0 %v439
        %470 = vmatmul.f32.gmra.mxu0 %v449
        %v471 = vpop.f32.mrf.mxu0
        %v472 = vadd.f32 0.0, %v471
        %473 = vmatmul.f32.gmra.mxu0 %v452
        %v474 = vpop.f32.mrf.mxu0
        %v475 = vadd.f32 0.0, %v474
        %476 = vdwg.mxu0
        %v478 = vsel %vm447, %v396, 0
        %v481 = vsel %vm447, %v399, 0
        %483 = vmatpush.msra.mxu0 0.0
        %484 = vmatpush.msra.mxu0 0.0
        %485 = vmatpush.msra.mxu0 0.0
        %486 = vmatpush.msra.mxu0 0.0
        %487 = vmatpush.msra.mxu0 0.0
        %488 = vmatpush.msra.mxu0 0.0
        %489 = vmatpush.msra.mxu0 0.0
        %490 = vmatpush.msra.mxu0 0.0
        %491 = vmatpush.msra.mxu0 %v437
        %492 = vmatpush.msra.mxu0 %v436
        %493 = vmatpush.msra.mxu0 %v435
        %494 = vmatpush.msra.mxu0 %v434
        %495 = vmatpush.msra.mxu0 %v433
        %496 = vmatpush.msra.mxu0 %v432
        %497 = vmatpush.msra.mxu0 %v431
        %498 = vmatpush.msra.mxu0 %v430
        %499 = vmatmul.f32.gmra.mxu0 %v478
        %v500 = vpop.f32.mrf.mxu0
        %v501 = vadd.f32 %v472, %v500
        %502 = vmatmul.f32.gmra.mxu0 %v481
        %v503 = vpop.f32.mrf.mxu0
        %v504 = vadd.f32 %v475, %v503
        %505 = vdwg.mxu0
        %s506 = scalar_lea.vmem [#allocation8], 128
        %v507 = vld [vmem:[%s506] sm:$0xff]
        %v508 = vld [vmem:[%s506 + $0x8] sm:$0xff]
        %v509 = vld [vmem:[%s506 + $0x10] sm:$0xff]
        %v510 = vld [vmem:[%s506 + $0x18] sm:$0xff]
        %v511 = vld [vmem:[%s506 + $0x20] sm:$0xff]
        %v512 = vld [vmem:[%s506 + $0x28] sm:$0xff]
        %v513 = vld [vmem:[%s506 + $0x30] sm:$0xff]
        %v514 = vld [vmem:[%s506 + $0x38] sm:$0xff]
        %v516 = vsel %vm447, %v425, 0
        %v519 = vsel %vm447, %v428, 0
        %521 = vmatpush.msra.mxu0 0.0
        %522 = vmatpush.msra.mxu0 0.0
        %523 = vmatpush.msra.mxu0 0.0
        %524 = vmatpush.msra.mxu0 0.0
        %525 = vmatpush.msra.mxu0 0.0
        %526 = vmatpush.msra.mxu0 0.0
        %527 = vmatpush.msra.mxu0 0.0
        %528 = vmatpush.msra.mxu0 0.0
        %529 = vmatpush.msra.mxu0 %v514
        %530 = vmatpush.msra.mxu0 %v513
        %531 = vmatpush.msra.mxu0 %v512
        %532 = vmatpush.msra.mxu0 %v511
        %533 = vmatpush.msra.mxu0 %v510
        %534 = vmatpush.msra.mxu0 %v509
        %535 = vmatpush.msra.mxu0 %v508
        %536 = vmatpush.msra.mxu0 %v507
        %537 = vmatmul.f32.gmra.mxu0 %v516
        %v538 = vpop.f32.mrf.mxu0
        %v539 = vadd.f32 0.0, %v538
        %540 = vmatmul.f32.gmra.mxu0 %v519
        %v541 = vpop.f32.mrf.mxu0
        %v542 = vadd.f32 0.0, %v541
        %543 = vdwg.mxu0
        %v544 = vadd.f32 %v501, %v539
        %v545 = vadd.f32 %v504, %v542
        %v546 = vld [vmem:[%s4] sm:$0x1]
        %v548 = vperm.slane %v546, 0
        %v550 = vadd.f32 %v544, %v548
        %v551 = vadd.f32 %v545, %v548
        %v552 = vmax.f32 %v550, 0.0
        %v553 = vmax.f32 %v551, 0.0
        %554 = vmatpush.msra.mxu0 0.0
        %555 = vmatpush.msra.mxu0 0.0
        %556 = vmatpush.msra.mxu0 0.0
        %557 = vmatpush.msra.mxu0 0.0
        %558 = vmatpush.msra.mxu0 0.0
        %559 = vmatpush.msra.mxu0 0.0
        %560 = vmatpush.msra.mxu0 0.0
        %561 = vmatpush.msra.mxu0 0.0
        %562 = vmatpush.msra.mxu0 0.0
        %563 = vmatpush.msra.mxu0 0.0
        %564 = vmatpush.msra.mxu0 0.0
        %565 = vmatpush.msra.mxu0 0.0
        %566 = vmatpush.msra.mxu0 0.0
        %567 = vmatpush.msra.mxu0 0.0
        %568 = vmatpush.msra.mxu0 %v553
        %569 = vmatpush.msra.mxu0 %v552
        %570 = vmatmul.f32.gmra.mxu0 %v373
        %v571 = vpop.f32.mrf.mxu0
        %v572 = vadd.f32 0.0, %v571
        %573 = vmatmul.f32.gmra.mxu0 %v376
        %v574 = vpop.f32.mrf.mxu0
        %v575 = vadd.f32 0.0, %v574
        %576 = vdwg.mxu0
        %577 = vmatpush.msra.mxu0 0.0
        %578 = vmatpush.msra.mxu0 0.0
        %579 = vmatpush.msra.mxu0 0.0
        %580 = vmatpush.msra.mxu0 0.0
        %581 = vmatpush.msra.mxu0 0.0
        %582 = vmatpush.msra.mxu0 0.0
        %583 = vmatpush.msra.mxu0 0.0
        %584 = vmatpush.msra.mxu0 0.0
        %585 = vmatpush.msra.mxu0 0.0
        %586 = vmatpush.msra.mxu0 0.0
        %587 = vmatpush.msra.mxu0 0.0
        %588 = vmatpush.msra.mxu0 0.0
        %589 = vmatpush.msra.mxu0 0.0
        %590 = vmatpush.msra.mxu0 0.0
        %591 = vmatpush.msra.mxu0 %v553
        %592 = vmatpush.msra.mxu0 %v552
        %593 = vmatmul.f32.gmra.mxu0 %v402
        %v594 = vpop.f32.mrf.mxu0
        %v595 = vadd.f32 0.0, %v594
        %596 = vmatmul.f32.gmra.mxu0 %v405
        %v597 = vpop.f32.mrf.mxu0
        %v598 = vadd.f32 0.0, %v597
        %599 = vdwg.mxu0
        %v600 = vld [vmem:[#allocation10] sm:$0xff]
        %v601 = vld [vmem:[#allocation10 + $0x8] sm:$0xff]
        %v602 = vld [vmem:[#allocation10 + $0x10] sm:$0xff]
        %v603 = vld [vmem:[#allocation10 + $0x18] sm:$0xff]
        %v604 = vld [vmem:[#allocation10 + $0x20] sm:$0xff]
        %v605 = vld [vmem:[#allocation10 + $0x28] sm:$0xff]
        %v606 = vld [vmem:[#allocation10 + $0x30] sm:$0xff]
        %v607 = vld [vmem:[#allocation10 + $0x38] sm:$0xff]
        %v608 = vld [vmem:[#allocation10 + $0x40] sm:$0xff]
        %v609 = vld [vmem:[#allocation10 + $0x48] sm:$0xff]
        %v610 = vld [vmem:[#allocation10 + $0x50] sm:$0xff]
        %v611 = vld [vmem:[#allocation10 + $0x58] sm:$0xff]
        %v612 = vld [vmem:[#allocation10 + $0x60] sm:$0xff]
        %v613 = vld [vmem:[#allocation10 + $0x68] sm:$0xff]
        %v614 = vld [vmem:[#allocation10 + $0x70] sm:$0xff]
        %v615 = vld [vmem:[#allocation10 + $0x78] sm:$0xff]
        %s616 = scalar_lea.vmem [#allocation10], 128
        %v617 = vld [vmem:[%s616] sm:$0xff]
        %v618 = vld [vmem:[%s616 + $0x8] sm:$0xff]
        %v619 = vld [vmem:[%s616 + $0x10] sm:$0xff]
        %v620 = vld [vmem:[%s616 + $0x18] sm:$0xff]
        %v621 = vld [vmem:[%s616 + $0x20] sm:$0xff]
        %v622 = vld [vmem:[%s616 + $0x28] sm:$0xff]
        %v623 = vld [vmem:[%s616 + $0x30] sm:$0xff]
        %v624 = vld [vmem:[%s616 + $0x38] sm:$0xff]
        %v625 = vld [vmem:[%s616 + $0x40] sm:$0xff]
        %v626 = vld [vmem:[%s616 + $0x48] sm:$0xff]
        %v627 = vld [vmem:[%s616 + $0x50] sm:$0xff]
        %v628 = vld [vmem:[%s616 + $0x58] sm:$0xff]
        %v629 = vld [vmem:[%s616 + $0x60] sm:$0xff]
        %v630 = vld [vmem:[%s616 + $0x68] sm:$0xff]
        %v631 = vld [vmem:[%s616 + $0x70] sm:$0xff]
        %v632 = vld [vmem:[%s616 + $0x78] sm:$0xff]
        %633 = vmatpush.msra.mxu0 %v632
        %634 = vmatpush.msra.mxu0 %v631
        %635 = vmatpush.msra.mxu0 %v630
        %636 = vmatpush.msra.mxu0 %v629
        %637 = vmatpush.msra.mxu0 %v628
        %638 = vmatpush.msra.mxu0 %v627
        %639 = vmatpush.msra.mxu0 %v626
        %640 = vmatpush.msra.mxu0 %v625
        %641 = vmatpush.msra.mxu0 %v624
        %642 = vmatpush.msra.mxu0 %v623
        %643 = vmatpush.msra.mxu0 %v622
        %644 = vmatpush.msra.mxu0 %v621
        %645 = vmatpush.msra.mxu0 %v620
        %646 = vmatpush.msra.mxu0 %v619
        %647 = vmatpush.msra.mxu0 %v618
        %648 = vmatpush.msra.mxu0 %v617
        %649 = vmatmul.f32.gmra.mxu0 %v552
        %v650 = vpop.f32.mrf.mxu0
        %v651 = vadd.f32 0.0, %v650
        %652 = vmatmul.f32.gmra.mxu0 %v553
        %v653 = vpop.f32.mrf.mxu0
        %v654 = vadd.f32 0.0, %v653
        %655 = vdwg.mxu0
        %656 = vmatpush.msra.mxu0 %v615
        %657 = vmatpush.msra.mxu0 %v614
        %658 = vmatpush.msra.mxu0 %v613
        %659 = vmatpush.msra.mxu0 %v612
        %660 = vmatpush.msra.mxu0 %v611
        %661 = vmatpush.msra.mxu0 %v610
        %662 = vmatpush.msra.mxu0 %v609
        %663 = vmatpush.msra.mxu0 %v608
        %664 = vmatpush.msra.mxu0 %v607
        %665 = vmatpush.msra.mxu0 %v606
        %666 = vmatpush.msra.mxu0 %v605
        %667 = vmatpush.msra.mxu0 %v604
        %668 = vmatpush.msra.mxu0 %v603
        %669 = vmatpush.msra.mxu0 %v602
        %670 = vmatpush.msra.mxu0 %v601
        %671 = vmatpush.msra.mxu0 %v600
        %672 = vmatmul.f32.gmra.mxu0 %v572
        %v673 = vpop.f32.mrf.mxu0
        %v674 = vadd.f32 %v651, %v673
        %675 = vmatmul.f32.gmra.mxu0 %v575
        %v676 = vpop.f32.mrf.mxu0
        %v677 = vadd.f32 %v654, %v676
        %678 = vdwg.mxu0
        %s679 = scalar_lea.vmem [#allocation10], 256
        %v680 = vld [vmem:[%s679] sm:$0xff]
        %v681 = vld [vmem:[%s679 + $0x8] sm:$0xff]
        %v682 = vld [vmem:[%s679 + $0x10] sm:$0xff]
        %v683 = vld [vmem:[%s679 + $0x18] sm:$0xff]
        %v684 = vld [vmem:[%s679 + $0x20] sm:$0xff]
        %v685 = vld [vmem:[%s679 + $0x28] sm:$0xff]
        %v686 = vld [vmem:[%s679 + $0x30] sm:$0xff]
        %v687 = vld [vmem:[%s679 + $0x38] sm:$0xff]
        %v688 = vld [vmem:[%s679 + $0x40] sm:$0xff]
        %v689 = vld [vmem:[%s679 + $0x48] sm:$0xff]
        %v690 = vld [vmem:[%s679 + $0x50] sm:$0xff]
        %v691 = vld [vmem:[%s679 + $0x58] sm:$0xff]
        %v692 = vld [vmem:[%s679 + $0x60] sm:$0xff]
        %v693 = vld [vmem:[%s679 + $0x68] sm:$0xff]
        %v694 = vld [vmem:[%s679 + $0x70] sm:$0xff]
        %v695 = vld [vmem:[%s679 + $0x78] sm:$0xff]
        %696 = vmatpush.msra.mxu0 %v695
        %697 = vmatpush.msra.mxu0 %v694
        %698 = vmatpush.msra.mxu0 %v693
        %699 = vmatpush.msra.mxu0 %v692
        %700 = vmatpush.msra.mxu0 %v691
        %701 = vmatpush.msra.mxu0 %v690
        %702 = vmatpush.msra.mxu0 %v689
        %703 = vmatpush.msra.mxu0 %v688
        %704 = vmatpush.msra.mxu0 %v687
        %705 = vmatpush.msra.mxu0 %v686
        %706 = vmatpush.msra.mxu0 %v685
        %707 = vmatpush.msra.mxu0 %v684
        %708 = vmatpush.msra.mxu0 %v683
        %709 = vmatpush.msra.mxu0 %v682
        %710 = vmatpush.msra.mxu0 %v681
        %711 = vmatpush.msra.mxu0 %v680
        %712 = vmatmul.f32.gmra.mxu0 %v595
        %v713 = vpop.f32.mrf.mxu0
        %v714 = vadd.f32 0.0, %v713
        %715 = vmatmul.f32.gmra.mxu0 %v598
        %v716 = vpop.f32.mrf.mxu0
        %v717 = vadd.f32 0.0, %v716
        %718 = vdwg.mxu0
        %v719 = vadd.f32 %v674, %v714
        %v720 = vadd.f32 %v677, %v717
        %v721 = vld [vmem:[%s6] sm:$0x1]
        %v723 = vperm.slane %v721, 0
        %v725 = vadd.f32 %v719, %v723
        %v726 = vadd.f32 %v720, %v723
        %v727 = vmax.f32 %v725, 0.0
        %v728 = vmax.f32 %v726, 0.0
        %729 = vst [vmem:[%s364] sm:$0xff] %v727
        %730 = vst [vmem:[%s364 + $0x8] sm:$0xff] %v728
        %s731 = sand.u32 %s186, 1
        %s732 = scalar_lea.sflag [#allocation4], %s731
        %s733 = sand.u32 %s186, 1
        %s734 = smul.addr %s733, 16
        %s735 = scalar_lea.vmem [#allocation11], %s734
        // Predicated region
        $region69: #{tpu_custom_call.1} parent=47 // pred_check
          %p736 = pneg %p196
        $region70: #{tpu_custom_call.1} parent=47 // pred_check_branch
          %738 = sbr.rel (%p736) target = $region72
        $region71: #{tpu_custom_call.1} parent=47 // pred_region
          %740 = vsyncadd %s732, 0
          %s741 = smul.addr %s26, 2
          %s742 = smul.addr %s741, 8
          %s743 = scalar_lea.hbm %s7, %s742
          %s744 = sshll.u32 %s735, 4
          %s745 = int_to_ptr.vmem [resolvable:$true] %s744
          %s746 = sshll.u32 %s743, 4
          %s747 = int_to_ptr.hbm [resolvable:$true] %s746
          %752 = dma.vmem_to_hbm [thread:$0]  %s745, 256, %s747, %s732, 128, 128, 8
        $region72: #{tpu_custom_call.1} parent=47 // pred_fallthru
          _
      $region48: #{tpu_custom_call.1} parent=5 // pred_fallthru
        _
      %p753 = scmp.le.s32.totalorder 2, %s21
      // Predicated region
      $region73: #{tpu_custom_call.1} parent=5 // pred_check
        %p754 = pneg %p753
      $region74: #{tpu_custom_call.1} parent=5 // pred_check_branch
        %756 = sbr.rel (%p754) target = $region76
      $region75: #{tpu_custom_call.1} parent=5 // pred_region
        %s757 = ssub.s32 %s21, 2
        // Predicated region
        $region77: #{tpu_custom_call.1} parent=75 // pred_check
          %p758 = pneg %p202
        $region78: #{tpu_custom_call.1} parent=75 // pred_check_branch
          %760 = sbr.rel (%p758) target = $region80
        $region79: #{tpu_custom_call.1} parent=75 // pred_region
          %s761 = sand.u32 %s187, 1
          %s762 = scalar_lea.sflag [#allocation4], %s761
          %s763 = sand.u32 %s187, 1
          %s764 = smul.addr %s763, 16
          %s765 = scalar_lea.vmem [#allocation11], %s764
          %767 = dma.done %s762, 256
        $region80: #{tpu_custom_call.1} parent=75 // pred_fallthru
          _
      $region76: #{tpu_custom_call.1} parent=5 // pred_fallthru
        _
    $region6: #{tpu_custom_call.1} parent=1 // loop_footer
      %s25 = sadd.s32 1, %s21
    $region7: #{tpu_custom_call.1} parent=1 // loop_footer_branch
      %20 = sbr.rel target = $region3
    $region8: #{tpu_custom_call.1} parent=1 // loop_exit
      _
    %768 = vsyncpa [#allocation3], 1
    %s769 = scalar_lea.sflag [#allocation3], 1
    %770 = vsyncpa %s769, 1
    %771 = vsyncpa [#allocation6], 1
    %772 = vsyncpa [#allocation9], 1
    %773 = vsyncpa [#allocation4], 1
    %s774 = scalar_lea.sflag [#allocation4], 1
    %775 = vsyncpa %s774, 1

</llo_original>
